<compile_context>
chip_gen: v5e
topology: v5e:2x2
jax: 0.10.0
libtpu: 0.0.40
codegen_flags: <defaults>
</compile_context>

<pallas_src>
import math

import jax
import jax.numpy as jnp
from jax.experimental import pallas as pl
from jax.experimental.pallas import tpu as pltpu


# -----------------------------------------------------------------------------------------
# Kernels
# -----------------------------------------------------------------------------------------
def _logclf_kernel(x_ref, w_ref, b_ref, o_ref):
    # x_ref: (TB, D) VMEM (streamed); w_ref: (1, D) VMEM (resident); b_ref: (1, 1) SMEM;
    # o_ref: (1, TB) VMEM (lane-dense).
    logits = jax.lax.dot_general(
        w_ref[...], x_ref[...],
        dimension_numbers=(((1,), (1,)), ((), ())),   # contract the feature axis
        preferred_element_type=jnp.float32,
    )  # (1, TB)
    o_ref[...] = jax.nn.sigmoid(logits + b_ref[0, 0]).astype(o_ref.dtype)


def _logclf_kernel_ktiled(x_ref, w_ref, b_ref, o_ref, acc_ref):
    # x_ref: (TB, TK); w_ref: (1, TK); b_ref: (1, 1) SMEM; o_ref: (1, TB);
    # acc_ref: (1, TB) f32 VMEM scratch (resident across the K axis).
    k = pl.program_id(1)

    @pl.when(k == 0)
    def _():
        acc_ref[...] = jnp.zeros_like(acc_ref)

    acc_ref[...] += jax.lax.dot_general(
        w_ref[...], x_ref[...],
        dimension_numbers=(((1,), (1,)), ((), ())),
        preferred_element_type=jnp.float32,
    )

    @pl.when(k == pl.num_programs(1) - 1)
    def _():
        o_ref[...] = jax.nn.sigmoid(acc_ref[...] + b_ref[0, 0]).astype(o_ref.dtype)


# -----------------------------------------------------------------------------------------
# Tile / budget selection
# -----------------------------------------------------------------------------------------
def _round_down(x, m):
    return (x // m) * m


def _budgets():
    """Per-x-buffer byte budget, scoped-VMEM limit, and a 'multi TensorCore' hint."""
    try:
        cap = int(pltpu.get_tpu_info().vmem_capacity_bytes)
    except Exception:
        cap = 64 * 1024 * 1024  # conservative fallback (v7x-sized)
    if cap <= 64 * 1024 * 1024:
        # v7x-like: 64 MiB physical VMEM per TC, 2 TCs per chip.
        return 8 * 1024 * 1024, 48 * 1024 * 1024, True
    # v5e / v6e: 128 MiB physical VMEM, single TC.
    return 16 * 1024 * 1024, 64 * 1024 * 1024, False


def _choose_tiles(B, D, itemsize, x_budget, min_sublane, multi_core):
    """Pick (TB, TK) so the double-buffered x tile is multi-MiB but within budget."""
    row_bytes = max(D * itemsize, 1)
    tb_full = x_budget // row_bytes                 # rows of a full-D tile within budget

    if tb_full >= 512:
        tb, tk = _round_down(tb_full, 512), D       # full-D rows, multi-MiB tile
    elif D % 128 == 0 and D > 128:
        # Wide features: tile K so batch tiles stay 512-row and lane-dense.
        cap = max(128, _round_down(x_budget // (512 * itemsize), 128))
        tk = min(D, cap)
        while tk > 128 and D % tk != 0:
            tk -= 128
        if D % tk != 0:
            tk = 128
        tb = 512
    else:
        # TODO(synk): masked K-tiling for huge D that is not a multiple of 128.
        tk = D
        tb = max(min_sublane, _round_down(tb_full, min_sublane))

    # Single batch block when it fits (and we don't need >=2 steps for two TensorCores).
    if B <= tb and not (multi_core and B >= 256):
        return B, tk
    if B < 256:
        return B, tk

    # Gridded along batch: keep the lane-dense out block a multiple of 128 lanes.
    tb = max(128, _round_down(tb, 128))
    if multi_core:
        tb = min(tb, max(128, _round_down(B // 4, 128)))  # >=2 grid steps -> both TCs busy
    return tb, tk


# -----------------------------------------------------------------------------------------
# Wrapper
# -----------------------------------------------------------------------------------------
def log_classifier_forward(x, weight, bias, *, batch_tile=None, k_tile=None):
    """x: (B, D); weight: (1, D); bias: (1,). Returns sigmoid(x @ W^T + b): (B, 1)."""
    B, D = x.shape
    itemsize = jnp.dtype(x.dtype).itemsize
    min_sublane = {1: 32, 2: 16, 4: 8}.get(itemsize, 8)

    x_budget, vmem_limit, multi_core = _budgets()
    auto_tb, auto_tk = _choose_tiles(B, D, itemsize, x_budget, min_sublane, multi_core)
    TB = min(batch_tile if batch_tile is not None else auto_tb, B)
    TK = min(k_tile if k_tile is not None else auto_tk, D)
    if TK < D and D % TK != 0:
        raise ValueError("k_tile must divide the feature dimension")

    w = weight.astype(x.dtype)                      # one-time cast; matched MXU operands
    b2d = bias.reshape(1, 1).astype(jnp.float32)    # scalar bias -> SMEM

    nb = pl.cdiv(B, TB)
    params = pltpu.CompilerParams(
        dimension_semantics=("parallel",) if TK >= D else ("parallel", "arbitrary"),
        vmem_limit_bytes=vmem_limit,
    )

    if TK >= D:
        out = pl.pallas_call(
            _logclf_kernel,
            out_shape=jax.ShapeDtypeStruct((1, B), x.dtype),
            grid=(nb,),
            in_specs=[
                pl.BlockSpec((TB, D), lambda i: (i, 0)),            # streamed batch tiles
                pl.BlockSpec((1, D), lambda i: (0, 0)),             # weight stays resident
                pl.BlockSpec(memory_space=pltpu.MemorySpace.SMEM),  # bias scalar
            ],
            out_specs=pl.BlockSpec((1, TB), lambda i: (0, i)),      # lane-dense output
            compiler_params=params,
        )(x, w, b2d)
    else:
        nk = D // TK
        out = pl.pallas_call(
            _logclf_kernel_ktiled,
            out_shape=jax.ShapeDtypeStruct((1, B), x.dtype),
            grid=(nb, nk),                                          # K axis last, "arbitrary"
            in_specs=[
                pl.BlockSpec((TB, TK), lambda i, k: (i, k)),
                pl.BlockSpec((1, TK), lambda i, k: (0, k)),
                pl.BlockSpec(memory_space=pltpu.MemorySpace.SMEM),
            ],
            out_specs=pl.BlockSpec((1, TB), lambda i, k: (0, i)),   # resident across K
            scratch_shapes=[pltpu.VMEM((1, TB), jnp.float32)],
            compiler_params=params,
        )(x, w, b2d)

    return out.reshape(B, 1)                                        # free reshape (row-major)


def init_params(key, input_size):
    """torch.nn.init.kaiming_uniform_(a=0, mode='fan_in', nonlinearity='sigmoid')
    (gain=1 -> bound=sqrt(3/fan_in)) for weight; zeros for bias."""
    bound = math.sqrt(3.0 / input_size)
    weight = jax.random.uniform(key, (1, input_size), jnp.float32, minval=-bound, maxval=bound)
    bias = jnp.zeros((1,), jnp.float32)
    return weight, bias


if __name__ == "__main__":
    key = jax.random.PRNGKey(0)
    k_x, k_w = jax.random.split(key)

    batch, input_size = 8, 32
    x = jax.random.normal(k_x, (batch, input_size), jnp.float32)
    weight, bias = init_params(k_w, input_size)

    out = jax.block_until_ready(log_classifier_forward(x, weight, bias))
    ref = jax.nn.sigmoid(x @ weight.T + bias)
    assert out.shape == (batch, 1)
    assert jnp.allclose(out, ref, atol=1e-5), "mismatch vs reference"

    # Gridded batch path (partial last block) with lane-dense (1, TB) output tiles.
    x2 = jax.random.normal(jax.random.fold_in(k_x, 1), (300, input_size), jnp.float32)
    out2 = jax.block_until_ready(log_classifier_forward(x2, weight, bias, batch_tile=128))
    ref2 = jax.nn.sigmoid(x2 @ weight.T + bias)
    assert jnp.allclose(out2, ref2, atol=1e-5), "mismatch vs reference (gridded)"

    # K-tiled wide-feature path: grid=(B/TB, D/TK), resident f32 accumulator + pl.when.
    k_x3, k_w3 = jax.random.split(jax.random.fold_in(key, 2))
    D3 = 256
    x3 = jax.random.normal(k_x3, (256, D3), jnp.float32)
    w3, b3 = init_params(k_w3, D3)
    out3 = jax.block_until_ready(
        log_classifier_forward(x3, w3, b3, batch_tile=128, k_tile=128))
    ref3 = jax.nn.sigmoid(x3 @ w3.T + b3)
    assert jnp.allclose(out3, ref3, atol=1e-4), "mismatch vs reference (k-tiled)"

    print("KERNEL_OK")
</pallas_src>

<mosaic_0001>
module attributes {stable_mosaic.version = 11 : i64} {
  func.func @_logclf_kernel(%arg0: i32, %arg1: memref<8x32xf32, #tpu.memory_space<vmem>>, %arg2: memref<1x32xf32, #tpu.memory_space<vmem>>, %arg3: memref<1x1xf32, #tpu.memory_space<smem>>, %arg4: memref<1x8xf32, #tpu.memory_space<vmem>>) attributes {dimension_semantics = [#tpu.dimension_semantics<parallel>], iteration_bounds = array<i64: 1>, scalar_prefetch = 0 : i64, scratch_operands = 0 : i64, tpu.core_type = #tpu.core_type<tc>, window_params = [{transform_indices = @transform_0, window_bounds = array<i64: 8, 32>}, {pipeline_mode = #tpu.pipeline_mode<synchronous>, transform_indices = @transform_1, window_bounds = array<i64: 1, 32>}, {transform_indices = @transform_2, window_bounds = array<i64: 1, 1>}, {transform_indices = @transform_3, window_bounds = array<i64: 1, 8>}]} {
    %c0 = arith.constant 0 : index
    %c0_0 = arith.constant 0 : index
    %0 = vector.load %arg2[%c0, %c0_0] : memref<1x32xf32, #tpu.memory_space<vmem>>, vector<1x32xf32>
    %c0_1 = arith.constant 0 : index
    %c0_2 = arith.constant 0 : index
    %1 = vector.load %arg1[%c0_1, %c0_2] : memref<8x32xf32, #tpu.memory_space<vmem>>, vector<8x32xf32>
    %cst = arith.constant dense<0.000000e+00> : vector<1x8xf32>
    %2 = tpu.matmul %0, %1, %cst {dimension_numbers = #tpu.dot_dimension_numbers<[1], [1], [0], [0], [0, 0, 1, 0], [], []>} : vector<1x32xf32>, vector<8x32xf32>, vector<1x8xf32> -> vector<1x8xf32>
    %c0_3 = arith.constant 0 : index
    %c0_4 = arith.constant 0 : index
    %3 = memref.load %arg3[%c0_3, %c0_4] : memref<1x1xf32, #tpu.memory_space<smem>>
    %4 = vector.broadcast %3 : f32 to vector<1x8xf32>
    %5 = arith.addf %2, %4 : vector<1x8xf32>
    %6 = arith.negf %5 : vector<1x8xf32>
    %7 = math.exp %6 : vector<1x8xf32>
    %cst_5 = arith.constant 1.000000e+00 : f32
    %8 = vector.broadcast %cst_5 : f32 to vector<1x8xf32>
    %9 = arith.addf %8, %7 : vector<1x8xf32>
    %10 = arith.divf %8, %9 : vector<1x8xf32>
    %c0_6 = arith.constant 0 : index
    %c0_7 = arith.constant 0 : index
    %11 = vector.load %arg4[%c0_6, %c0_7] : memref<1x8xf32, #tpu.memory_space<vmem>>, vector<1x8xf32>
    tpu.vector_store %arg4[%c0_6, %c0_7], %10 {strides = array<i32>} : memref<1x8xf32, #tpu.memory_space<vmem>>, vector<1x8xf32>,
    return
  }
  func.func @transform_0(%arg0: i32) -> (i32, i32) {
    %c0_i32 = arith.constant 0 : i32
    %c0_i32_0 = arith.constant 0 : i32
    return %arg0, %c0_i32 : i32, i32
  }
  func.func @transform_1(%arg0: i32) -> (i32, i32) {
    %c0_i32 = arith.constant 0 : i32
    %c0_i32_0 = arith.constant 0 : i32
    %c0_i32_1 = arith.constant 0 : i32
    return %c0_i32, %c0_i32_0 : i32, i32
  }
  func.func @transform_2(%arg0: i32) -> (i32, i32) {
    %c0_i32 = arith.constant 0 : i32
    %c0_i32_0 = arith.constant 0 : i32
    %c0_i32_1 = arith.constant 0 : i32
    return %c0_i32, %c0_i32_0 : i32, i32
  }
  func.func @transform_3(%arg0: i32) -> (i32, i32) {
    %c0_i32 = arith.constant 0 : i32
    %c0_i32_0 = arith.constant 0 : i32
    return %c0_i32, %arg0 : i32, i32
  }
}

</mosaic_0001>

<llo_original>
// kernel: tpu_custom_call.1
$region0: #{tpu_custom_call.1}
  #allocation0 [shape = 'u32[]', space=smem, size = 0x4, offset = 0x4, fixed_abs, tag = 'smem constant byte address 0x4 - core index']
  #allocation1 [shape = 'u32[72,128]{1,0:T(1,128)}', space=vmem, size = 0x9000, scoped, tag = 'internal scratch']
  #allocation2 [shape = 'f32[1,1]{1,0:T(1,128)S(6)}', space=smem, size = 0x200, scoped, tag = 'scoped memory for tpu_custom_call.1']
  %s0 = inlined_call_operand.hbm [shape: f32[8,32], index: 0, kind: input, shape index: {}]
  %s1 = inlined_call_operand.vmem [shape: f32[1,32], index: 1, kind: input, shape index: {}]
  %s2 = inlined_call_operand.<no memory space> [shape: f32[1,1], index: 2, kind: input, shape index: {}]
  %s3 = inlined_call_operand.hbm [shape: f32[1,8], index: 3, kind: output, shape index: {}]
  %s4 = sld [smem:[#allocation0]]
  $region26: #{tpu_custom_call.1} parent=0
    _
  %s6 = ssub.s32 1, %s4
  %s7 = scalar_select 0, %s6, %s4
  %8 = sst [smem:[#allocation2]] %s2
  $region1: #{tpu_custom_call.1} parent=0
    #allocation3 [shape = 'u8[4096]{0}', space=vmem, size = 0x1000, scoped, tag = 'input window, operand 0, single buffered']
    #allocation4 [shape = 's32[1]{0}', space=sflag, size = 0x4, scoped, tag = 'scoped memory for tpu_custom_call.1']
    #allocation5 [shape = 's32[1]{0}', space=sflag, size = 0x4, scoped, tag = 'scoped memory for tpu_custom_call.1']
    #allocation6 [shape = 'u8[512]{0}', space=vmem, size = 0x400, scoped, tag = 'output window, operand 0, single buffered']
    %9 = vsyncpa [#allocation4], 0
    %10 = vsyncpa [#allocation5], 0
    // Predicated region
    $region2: #{tpu_custom_call.1} parent=1 // pred_check
      _
    $region3: #{tpu_custom_call.1} parent=1 // pred_check_branch
      %12 = sbr.rel (0) target = $region5
    $region4: #{tpu_custom_call.1} parent=1 // pred_region
      %14 = vsyncadd [#allocation4], 0
      %s16 = sshll.u32 %s0, 4
      %s17 = int_to_ptr.hbm [resolvable:$true] %s16
      %s18 = sshll.u32 [#allocation3], 4
      %s19 = int_to_ptr.vmem [resolvable:$true] %s18
      %21 = dma.hbm_to_vmem [thread:$0]  %s17, 128, %s19, [#allocation4]
    $region5: #{tpu_custom_call.1} parent=1 // pred_fallthru
      _
    // Predicated region
    $region6: #{tpu_custom_call.1} parent=1 // pred_check
      _
    $region7: #{tpu_custom_call.1} parent=1 // pred_check_branch
      %23 = sbr.rel (0) target = $region9
    $region8: #{tpu_custom_call.1} parent=1 // pred_region
      _
    $region9: #{tpu_custom_call.1} parent=1 // pred_fallthru
      _
    // Predicated region
    $region10: #{tpu_custom_call.1} parent=1 // pred_check
      _
    $region11: #{tpu_custom_call.1} parent=1 // pred_check_branch
      %25 = sbr.rel (0) target = $region13
    $region12: #{tpu_custom_call.1} parent=1 // pred_region
      _
    $region13: #{tpu_custom_call.1} parent=1 // pred_fallthru
      _
    // Predicated region
    $region14: #{tpu_custom_call.1} parent=1 // pred_check
      _
    $region15: #{tpu_custom_call.1} parent=1 // pred_check_branch
      %27 = sbr.rel (0) target = $region17
    $region16: #{tpu_custom_call.1} parent=1 // pred_region
      %29 = dma.done [#allocation4], 128
    $region17: #{tpu_custom_call.1} parent=1 // pred_fallthru
      _
    %v30 = vld [vmem:[%s1] sm:$0x1]
    %v31 = vld [vmem:[#allocation3] sm:$0xff]
    %s32 = sld [smem:[#allocation2]]
    %v33 = vstv %s32
    %vm34 = vcmask 261120
    %v36 = vsel %vm34, %v30, 0
    %v39 = vsel %vm34, %v31, 0
    %41 = vmatpush.xpose.msra.mxu0 0.0
    %42 = vmatpush.xpose.msra.mxu0 0.0
    %43 = vmatpush.xpose.msra.mxu0 0.0
    %44 = vmatpush.xpose.msra.mxu0 0.0
    %45 = vmatpush.xpose.msra.mxu0 0.0
    %46 = vmatpush.xpose.msra.mxu0 0.0
    %47 = vmatpush.xpose.msra.mxu0 0.0
    %48 = vmatpush.xpose.msra.mxu0 0.0
    %49 = vmatpush.xpose.msra.mxu0 0.0
    %50 = vmatpush.xpose.msra.mxu0 0.0
    %51 = vmatpush.xpose.msra.mxu0 0.0
    %52 = vmatpush.xpose.msra.mxu0 0.0
    %53 = vmatpush.xpose.msra.mxu0 0.0
    %54 = vmatpush.xpose.msra.mxu0 0.0
    %55 = vmatpush.xpose.msra.mxu0 0.0
    %56 = vmatpush.xpose.msra.mxu0 %v39
    %57 = vmatmul.f32.gmra.mxu0 %v36
    %v58 = vpop.f32.mrf.mxu0
    %v59 = vadd.f32 %v33, %v58
    %60 = vdwg.mxu0
    %v61 = vxor.u32 %v59, 2147483648
    %v62 = vmul.f32 %v61, 1.442695
    %v63 = vpow.pop %v62
    %v64 = vadd.f32 %v63, 1.0
    %v65 = vrcp.pop %v64
    %v66 = vmul.f32 %v64, %v65
    %v67 = vsub.f32 1.0, %v66
    %v68 = vmul.f32 %v65, %v67
    %v69 = vadd.f32 %v65, %v68
    %vm70 = vweird.f32 %v64
    %vm71 = vweird.f32 %v65
    %vm72 = vmor %vm70, %vm71
    %v73 = vsel %vm72, %v65, %v69
    %v74 = vand.u32 2147483647, %v64
    %vm75 = vcmp.eq.f32.partialorder %v74, 8.507059e+37
    %v76 = vand.u32 %v64, 2147483648
    %v77 = vor.u32 1.1754944e-38, %v76
    %v78 = vsel %vm75, %v77, %v73
    %v79 = vmul.f32 1.0, %v78
    %vm80 = vcmask 57344
    %81 = vst.msk [vmem:[#allocation6] sm:$0x1] %vm80, %v79
    // Predicated region
    $region18: #{tpu_custom_call.1} parent=1 // pred_check
      _
    $region19: #{tpu_custom_call.1} parent=1 // pred_check_branch
      %83 = sbr.rel (0) target = $region21
    $region20: #{tpu_custom_call.1} parent=1 // pred_region
      %85 = vsyncadd [#allocation5], 0
      %s87 = sshll.u32 [#allocation6], 4
      %s88 = int_to_ptr.vmem [resolvable:$true] %s87
      %s89 = sshll.u32 %s3, 4
      %s90 = int_to_ptr.hbm [resolvable:$true] %s89
      %92 = dma.vmem_to_hbm [thread:$0]  %s88, 16, %s90, [#allocation5]
    $region21: #{tpu_custom_call.1} parent=1 // pred_fallthru
      _
    // Predicated region
    $region22: #{tpu_custom_call.1} parent=1 // pred_check
      _
    $region23: #{tpu_custom_call.1} parent=1 // pred_check_branch
      %94 = sbr.rel (0) target = $region25
    $region24: #{tpu_custom_call.1} parent=1 // pred_region
      %96 = dma.done [#allocation5], 16
    $region25: #{tpu_custom_call.1} parent=1 // pred_fallthru
      _
    %97 = vsyncpa [#allocation4], 1
    %98 = vsyncpa [#allocation5], 1

</llo_original>
